<compile_context>
chip_gen: v7x
topology: tpu7x:2x2x1
jax: 0.10.0
libtpu: 0.0.40
codegen_flags: <defaults>
</compile_context>

<pallas_src>
import functools

import jax
import jax.numpy as jnp
from jax.experimental import pallas as pl
from jax.experimental.pallas import tpu as pltpu

N_CLASSES = 4
OUT_LANES = 16  # logits(4) | hazards(4) | S(4) | yhat(1) | pad(3)


def _round_up(x, m):
    return ((x + m - 1) // m) * m


def _heads_slab(logits):
    """sigmoid / cumprod(1-h) / first-max argmax packed with logits -> [rows, 16]."""
    hazards = jax.nn.sigmoid(logits)
    one_m = 1.0 - hazards
    s0 = one_m[:, 0:1]
    s1 = s0 * one_m[:, 1:2]
    s2 = s1 * one_m[:, 2:3]
    s3 = s2 * one_m[:, 3:4]
    maxv = jnp.max(logits, axis=-1, keepdims=True)
    ids = jax.lax.broadcasted_iota(jnp.int32, logits.shape, 1)
    yhat = jnp.min(jnp.where(logits == maxv, ids, N_CLASSES),
                   axis=-1, keepdims=True).astype(jnp.float32)
    pad = jnp.zeros((logits.shape[0], OUT_LANES - 3 * N_CLASSES - 1),
                    jnp.float32)
    return jnp.concatenate([logits, hazards, s0, s1, s2, s3, yhat, pad],
                           axis=-1)


# -----------------------------------------------------------------------------
# Fused path: adj resident in VMEM, read from HBM exactly once.
# -----------------------------------------------------------------------------
def gcn_fused_kernel(adj_ref, xw1_ref, b1_ref, w2_ref, b2_ref, wc_ref, bc_ref,
                     out_ref):
    adj = adj_ref[...]                                            # f32 resident
    h1 = jnp.maximum(
        jnp.dot(adj, xw1_ref[...], preferred_element_type=jnp.float32)
        + b1_ref[...], 0.0)
    h1w2 = jnp.dot(h1, w2_ref[...], preferred_element_type=jnp.float32)
    h2 = jnp.maximum(
        jnp.dot(adj, h1w2, preferred_element_type=jnp.float32)
        + b2_ref[...], 0.0)
    logits = jnp.dot(h2, wc_ref[...],
                     preferred_element_type=jnp.float32) + bc_ref[...]
    out_ref[...] = _heads_slab(logits)


def _fused_call(adj, xw1, b1, w2, b2, wc, bc, n, d):
    def full2(shape):
        return pl.BlockSpec(shape, lambda i: (0, 0))

    flops = 4 * n * n * d + 2 * n * d * d + 2 * n * d * N_CLASSES
    bytes_acc = (4 * n * n + 4 * n * d + 4 * (2 * d * d + d * N_CLASSES)
                 + 4 * n * OUT_LANES)
    return pl.pallas_call(
        gcn_fused_kernel,
        grid=(1,),
        in_specs=[full2((n, n)), full2((n, d)), full2((1, d)), full2((d, d)),
                  full2((1, d)), full2((d, N_CLASSES)),
                  full2((1, N_CLASSES))],
        out_specs=full2((n, OUT_LANES)),
        out_shape=jax.ShapeDtypeStruct((n, OUT_LANES), jnp.float32),
        compiler_params=pltpu.CompilerParams(
            dimension_semantics=("arbitrary",),
            vmem_limit_bytes=64 * 1024 * 1024),
        cost_estimate=pl.CostEstimate(flops=flops,
                                      transcendentals=n * N_CLASSES,
                                      bytes_accessed=bytes_acc),
    )(adj, xw1, b1, w2, b2, wc, bc)


# -----------------------------------------------------------------------------
# Streaming path: adj tiled (tm, tk) over grid (rows, K-cols), f32->bf16 cast
# per tile, f32 VMEM accumulator, weight matmul folded into the K==last epilogue.
# -----------------------------------------------------------------------------
def gcn_layer1_kernel(adj_ref, xw1_ref, b1_ref, w2_ref, out_ref, acc_ref):
    k = pl.program_id(1)

    @pl.when(k == 0)
    def _():
        acc_ref[...] = jnp.zeros_like(acc_ref)

    a_bf = adj_ref[...].astype(jnp.bfloat16)
    acc_ref[...] += jnp.dot(a_bf, xw1_ref[...],
                            preferred_element_type=jnp.float32)

    @pl.when(k == pl.num_programs(1) - 1)
    def _():
        h1 = jnp.maximum(acc_ref[...] + b1_ref[...], 0.0)
        # fold the layer-2 weight here: out = relu(adj @ xw1 + b1) @ W2
        out_ref[...] = jnp.dot(h1.astype(jnp.bfloat16), w2_ref[...],
                               preferred_element_type=jnp.float32
                               ).astype(out_ref.dtype)


def gcn_layer2_head_kernel(adj_ref, hw2_ref, b2_ref, wc_ref, bc_ref,
                           out_ref, acc_ref):
    k = pl.program_id(1)

    @pl.when(k == 0)
    def _():
        acc_ref[...] = jnp.zeros_like(acc_ref)

    a_bf = adj_ref[...].astype(jnp.bfloat16)
    acc_ref[...] += jnp.dot(a_bf, hw2_ref[...],
                            preferred_element_type=jnp.float32)

    @pl.when(k == pl.num_programs(1) - 1)
    def _():
        h2 = jnp.maximum(acc_ref[...] + b2_ref[...], 0.0)
        logits = jnp.dot(h2.astype(jnp.bfloat16), wc_ref[...],
                         preferred_element_type=jnp.float32) + bc_ref[...]
        out_ref[...] = _heads_slab(logits)


def _streaming_call(adj, xw1, b1, w2, b2, wc, bc, n, d, row_tile, col_tile):
    assert row_tile % 16 == 0, "row_tile must be a multiple of 16 (bf16 sublane)"
    assert col_tile % 128 == 0, "col_tile must be a multiple of 128 (lane)"
    assert col_tile % row_tile == 0, "col_tile must be a multiple of row_tile"

    tk = min(col_tile, _round_up(n, row_tile))
    tm = min(row_tile, tk)
    np_ = _round_up(n, tk)

    if np_ != n:
        adj_p = jnp.pad(adj, ((0, np_ - n), (0, np_ - n)))
        xw1_p = jnp.pad(xw1, ((0, np_ - n), (0, 0)))
    else:
        adj_p, xw1_p = adj, xw1

    xw1_bf = xw1_p.astype(jnp.bfloat16)
    w2_bf = w2.astype(jnp.bfloat16)
    wc_bf = wc.astype(jnp.bfloat16)

    grid = (np_ // tm, np_ // tk)
    cparams = pltpu.CompilerParams(
        dimension_semantics=("parallel", "arbitrary"),
        vmem_limit_bytes=64 * 1024 * 1024)

    adj_spec = pl.BlockSpec((tm, tk), lambda i, k: (i, k))
    col_spec = pl.BlockSpec((tk, d), lambda i, k: (k, 0))

    def const2(shape):
        return pl.BlockSpec(shape, lambda i, k: (0, 0))

    layer_flops = 2 * np_ * np_ * d + 2 * np_ * d * d
    layer_bytes = 4 * np_ * np_ + 2 * np_ * d + 2 * np_ * d + 4 * d * d

    h1w2 = pl.pallas_call(
        gcn_layer1_kernel,
        grid=grid,
        in_specs=[adj_spec, col_spec, const2((1, d)), const2((d, d))],
        out_specs=pl.BlockSpec((tm, d), lambda i, k: (i, 0)),
        out_shape=jax.ShapeDtypeStruct((np_, d), jnp.bfloat16),
        scratch_shapes=[pltpu.VMEM((tm, d), jnp.float32)],
        compiler_params=cparams,
        cost_estimate=pl.CostEstimate(flops=layer_flops, transcendentals=0,
                                      bytes_accessed=layer_bytes),
    )(adj_p, xw1_bf, b1, w2_bf)

    slab = pl.pallas_call(
        gcn_layer2_head_kernel,
        grid=grid,
        in_specs=[adj_spec, col_spec, const2((1, d)),
                  const2((d, N_CLASSES)), const2((1, N_CLASSES))],
        out_specs=pl.BlockSpec((tm, OUT_LANES), lambda i, k: (i, 0)),
        out_shape=jax.ShapeDtypeStruct((np_, OUT_LANES), jnp.float32),
        scratch_shapes=[pltpu.VMEM((tm, d), jnp.float32)],
        compiler_params=cparams,
        cost_estimate=pl.CostEstimate(
            flops=layer_flops + 2 * np_ * d * N_CLASSES,
            transcendentals=np_ * N_CLASSES,
            bytes_accessed=layer_bytes + 4 * np_ * OUT_LANES),
    )(adj_p, h1w2, b2, wc_bf, bc)

    return slab[:n]


# -----------------------------------------------------------------------------
# Public forward
# -----------------------------------------------------------------------------
def gcn_survival_forward(features, adj, params, *, row_tile=256, col_tile=1024,
                         fused_vmem_budget=48 * 1024 * 1024,
                         force_streaming=False):
    """features: [N, 64], adj: [N, N].  Returns (hazards, S, Y_hat, logits)."""
    n, d = features.shape
    assert adj.shape == (n, n)

    w1 = params["w1"].astype(jnp.float32)
    w2 = params["w2"].astype(jnp.float32)
    wc = params["wc"].astype(jnp.float32)
    b1 = params["b1"].astype(jnp.float32).reshape(1, d)
    b2 = params["b2"].astype(jnp.float32).reshape(1, d)
    bc = params["bc"].astype(jnp.float32).reshape(1, N_CLASSES)

    adj_f32 = adj.astype(jnp.float32)
    # Hoisted out of the per-tile path: x @ W1 is O(N*d^2), negligible next to
    # the O(N^2 * d) adjacency matmuls.
    xw1 = features.astype(jnp.float32) @ w1

    # Conservative fused-path VMEM estimate (assume double-buffered adj).
    fused_bytes = 8 * n * n + 32 * n * d
    if (not force_streaming) and fused_bytes <= fused_vmem_budget:
        slab = _fused_call(adj_f32, xw1, b1, w2, b2, wc, bc, n, d)
    else:
        slab = _streaming_call(adj_f32, xw1, b1, w2, b2, wc, bc, n, d,
                               row_tile, col_tile)

    logits = slab[:, 0:4]
    hazards = slab[:, 4:8]
    S = slab[:, 8:12]
    # TODO(synk): torch.topk returns int64 indices; emitted here as int32.
    y_hat = slab[:, 12:13].astype(jnp.int32)
    return hazards, S, y_hat, logits


def init_params(key, input_dim=64, out_classes=N_CLASSES):
    """Deterministic nn.Linear-style init.  Weights stored as [in, out]."""
    def linear(k, d_in, d_out):
        kw, kb = jax.random.split(k)
        bound = 1.0 / jnp.sqrt(d_in)
        w = jax.random.uniform(kw, (d_in, d_out), jnp.float32, -bound, bound)
        b = jax.random.uniform(kb, (1, d_out), jnp.float32, -bound, bound)
        return w, b

    k1, k2, k3 = jax.random.split(key, 3)
    w1, b1 = linear(k1, input_dim, input_dim)     # gcn1.linear: 64 -> 64
    w2, b2 = linear(k2, input_dim, input_dim)     # gcn2.linear: 64 -> 64
    wc, bc = linear(k3, input_dim, out_classes)   # classifier: 64 -> 4
    return {"w1": w1, "b1": b1, "w2": w2, "b2": b2, "wc": wc, "bc": bc}


def _ref_forward(features, adj, params):
    h = jnp.maximum(adj @ features @ params["w1"] + params["b1"], 0.0)
    h = jnp.maximum(adj @ h @ params["w2"] + params["b2"], 0.0)
    logits = h @ params["wc"] + params["bc"]
    hazards = jax.nn.sigmoid(logits)
    S = jnp.cumprod(1.0 - hazards, axis=-1)
    y_hat = jnp.argmax(logits, axis=-1, keepdims=True).astype(jnp.int32)
    return hazards, S, y_hat, logits


def _check(out, features, adj, params):
    hazards, S, y_hat, logits = out
    _, _, _, ref_logits = _ref_forward(features, adj, params)
    assert jnp.allclose(logits, ref_logits, atol=3e-2, rtol=3e-2)
    # internal consistency of the heads vs. the kernel's own logits
    assert jnp.allclose(hazards, jax.nn.sigmoid(logits), atol=1e-5)
    assert jnp.allclose(S, jnp.cumprod(1.0 - hazards, axis=-1), atol=1e-5)
    assert jnp.array_equal(
        y_hat, jnp.argmax(logits, axis=-1, keepdims=True).astype(jnp.int32))


if __name__ == "__main__":
    key = jax.random.PRNGKey(0)
    k_feat, k_adj, k_params, k_feat2, k_adj2 = jax.random.split(key, 5)
    D = 64
    params = init_params(k_params, input_dim=D)

    def make_graph(kf, ka, n):
        feats = jax.random.normal(kf, (n, D), jnp.float32)
        amat = (jax.random.uniform(ka, (n, n)) > 0.5).astype(jnp.float32)
        amat = jnp.maximum(amat, amat.T) + jnp.eye(n, dtype=jnp.float32)
        return feats, amat / jnp.sum(amat, axis=-1, keepdims=True)

    # --- 1) fused path (adj VMEM-resident, single HBM read of adj) ---
    feats_s, adj_s = make_graph(k_feat, k_adj, 24)
    fused_fwd = jax.jit(gcn_survival_forward)
    out_fused = fused_fwd(feats_s, adj_s, params)
    jax.block_until_ready(out_fused)
    _check(out_fused, feats_s, adj_s, params)

    # --- 2) streaming path (row x K tiled adj, bf16 MXU, f32 accumulate) ---
    feats_m, adj_m = make_graph(k_feat2, k_adj2, 200)
    stream_fwd = jax.jit(functools.partial(
        gcn_survival_forward, force_streaming=True, row_tile=16, col_tile=128))
    out_stream = stream_fwd(feats_m, adj_m, params)
    jax.block_until_ready(out_stream)
    _check(out_stream, feats_m, adj_m, params)

    print("KERNEL_OK")
</pallas_src>

<mosaic_0001>
module attributes {stable_mosaic.version = 11 : i64} {
  func.func @gcn_fused_kernel(%arg0: i32, %arg1: memref<24x24xf32, #tpu.memory_space<vmem>>, %arg2: memref<24x64xf32, #tpu.memory_space<vmem>>, %arg3: memref<1x64xf32, #tpu.memory_space<vmem>>, %arg4: memref<64x64xf32, #tpu.memory_space<vmem>>, %arg5: memref<1x64xf32, #tpu.memory_space<vmem>>, %arg6: memref<64x4xf32, #tpu.memory_space<vmem>>, %arg7: memref<1x4xf32, #tpu.memory_space<vmem>>, %arg8: memref<24x16xf32, #tpu.memory_space<vmem>>) attributes {dimension_semantics = [#tpu.dimension_semantics<arbitrary>], iteration_bounds = array<i64: 1>, scalar_prefetch = 0 : i64, scratch_operands = 0 : i64, tpu.core_type = #tpu.core_type<tc>, window_params = [{pipeline_mode = #tpu.pipeline_mode<synchronous>, transform_indices = @transform_0, window_bounds = array<i64: 24, 24>}, {pipeline_mode = #tpu.pipeline_mode<synchronous>, transform_indices = @transform_1, window_bounds = array<i64: 24, 64>}, {pipeline_mode = #tpu.pipeline_mode<synchronous>, transform_indices = @transform_2, window_bounds = array<i64: 1, 64>}, {pipeline_mode = #tpu.pipeline_mode<synchronous>, transform_indices = @transform_3, window_bounds = array<i64: 64, 64>}, {pipeline_mode = #tpu.pipeline_mode<synchronous>, transform_indices = @transform_4, window_bounds = array<i64: 1, 64>}, {pipeline_mode = #tpu.pipeline_mode<synchronous>, transform_indices = @transform_5, window_bounds = array<i64: 64, 4>}, {pipeline_mode = #tpu.pipeline_mode<synchronous>, transform_indices = @transform_6, window_bounds = array<i64: 1, 4>}, {pipeline_mode = #tpu.pipeline_mode<synchronous>, transform_indices = @transform_7, window_bounds = array<i64: 24, 16>}]} {
    %c0 = arith.constant 0 : index
    %c0_0 = arith.constant 0 : index
    %0 = vector.load %arg1[%c0, %c0_0] : memref<24x24xf32, #tpu.memory_space<vmem>>, vector<24x24xf32>
    %c0_1 = arith.constant 0 : index
    %c0_2 = arith.constant 0 : index
    %1 = vector.load %arg2[%c0_1, %c0_2] : memref<24x64xf32, #tpu.memory_space<vmem>>, vector<24x64xf32>
    %cst = arith.constant dense<0.000000e+00> : vector<24x64xf32>
    %2 = tpu.matmul %0, %1, %cst {dimension_numbers = #tpu.dot_dimension_numbers<[1], [0], [0], [1], [0, 0, 1, 1], [], []>} : vector<24x24xf32>, vector<24x64xf32>, vector<24x64xf32> -> vector<24x64xf32>
    %c0_3 = arith.constant 0 : index
    %c0_4 = arith.constant 0 : index
    %3 = vector.load %arg3[%c0_3, %c0_4] : memref<1x64xf32, #tpu.memory_space<vmem>>, vector<1x64xf32>
    %4 = vector.broadcast %3 : vector<1x64xf32> to vector<24x64xf32>
    %5 = arith.addf %2, %4 : vector<24x64xf32>
    %cst_5 = arith.constant 0.000000e+00 : f32
    %6 = vector.broadcast %cst_5 : f32 to vector<24x64xf32>
    %7 = arith.maximumf %5, %6 : vector<24x64xf32>
    %c0_6 = arith.constant 0 : index
    %c0_7 = arith.constant 0 : index
    %8 = vector.load %arg4[%c0_6, %c0_7] : memref<64x64xf32, #tpu.memory_space<vmem>>, vector<64x64xf32>
    %cst_8 = arith.constant dense<0.000000e+00> : vector<24x64xf32>
    %9 = tpu.matmul %7, %8, %cst_8 {dimension_numbers = #tpu.dot_dimension_numbers<[1], [0], [0], [1], [0, 0, 1, 1], [], []>} : vector<24x64xf32>, vector<64x64xf32>, vector<24x64xf32> -> vector<24x64xf32>
    %cst_9 = arith.constant dense<0.000000e+00> : vector<24x64xf32>
    %10 = tpu.matmul %0, %9, %cst_9 {dimension_numbers = #tpu.dot_dimension_numbers<[1], [0], [0], [1], [0, 0, 1, 1], [], []>} : vector<24x24xf32>, vector<24x64xf32>, vector<24x64xf32> -> vector<24x64xf32>
    %c0_10 = arith.constant 0 : index
    %c0_11 = arith.constant 0 : index
    %11 = vector.load %arg5[%c0_10, %c0_11] : memref<1x64xf32, #tpu.memory_space<vmem>>, vector<1x64xf32>
    %12 = vector.broadcast %11 : vector<1x64xf32> to vector<24x64xf32>
    %13 = arith.addf %10, %12 : vector<24x64xf32>
    %cst_12 = arith.constant 0.000000e+00 : f32
    %14 = vector.broadcast %cst_12 : f32 to vector<24x64xf32>
    %15 = arith.maximumf %13, %14 : vector<24x64xf32>
    %c0_13 = arith.constant 0 : index
    %c0_14 = arith.constant 0 : index
    %16 = vector.load %arg6[%c0_13, %c0_14] : memref<64x4xf32, #tpu.memory_space<vmem>>, vector<64x4xf32>
    %cst_15 = arith.constant dense<0.000000e+00> : vector<24x4xf32>
    %17 = tpu.matmul %15, %16, %cst_15 {dimension_numbers = #tpu.dot_dimension_numbers<[1], [0], [0], [1], [0, 0, 1, 1], [], []>} : vector<24x64xf32>, vector<64x4xf32>, vector<24x4xf32> -> vector<24x4xf32>
    %c0_16 = arith.constant 0 : index
    %c0_17 = arith.constant 0 : index
    %18 = vector.load %arg7[%c0_16, %c0_17] : memref<1x4xf32, #tpu.memory_space<vmem>>, vector<1x4xf32>
    %19 = vector.broadcast %18 : vector<1x4xf32> to vector<24x4xf32>
    %20 = arith.addf %17, %19 : vector<24x4xf32>
    %21 = arith.negf %20 : vector<24x4xf32>
    %22 = math.exp %21 : vector<24x4xf32>
    %cst_18 = arith.constant 1.000000e+00 : f32
    %23 = vector.broadcast %cst_18 : f32 to vector<24x4xf32>
    %24 = arith.addf %23, %22 : vector<24x4xf32>
    %25 = arith.divf %23, %24 : vector<24x4xf32>
    %cst_19 = arith.constant 1.000000e+00 : f32
    %26 = vector.broadcast %cst_19 : f32 to vector<24x4xf32>
    %27 = arith.subf %26, %25 : vector<24x4xf32>
    %28 = vector.extract_strided_slice %27 {offsets = [0, 0], sizes = [24, 1], strides = [1, 1]} : vector<24x4xf32> to vector<24x1xf32>
    %29 = vector.extract_strided_slice %27 {offsets = [0, 1], sizes = [24, 1], strides = [1, 1]} : vector<24x4xf32> to vector<24x1xf32>
    %30 = arith.mulf %28, %29 : vector<24x1xf32>
    %31 = vector.extract_strided_slice %27 {offsets = [0, 2], sizes = [24, 1], strides = [1, 1]} : vector<24x4xf32> to vector<24x1xf32>
    %32 = arith.mulf %30, %31 : vector<24x1xf32>
    %33 = vector.extract_strided_slice %27 {offsets = [0, 3], sizes = [24, 1], strides = [1, 1]} : vector<24x4xf32> to vector<24x1xf32>
    %34 = arith.mulf %32, %33 : vector<24x1xf32>
    %cst_20 = arith.constant dense<0xFF800000> : vector<24xf32>
    %35 = vector.multi_reduction <maximumf>, %20, %cst_20 [1] : vector<24x4xf32> to vector<24xf32>
    %36 = vector.shape_cast %35 : vector<24xf32> to vector<24x1xf32>
    %37 = tpu.iota {dimensions = array<i32: 1>} : vector<24x4xi32>
    %38 = vector.broadcast %36 : vector<24x1xf32> to vector<24x4xf32>
    %39 = arith.cmpf oeq, %20, %38 : vector<24x4xf32>
    %c4_i32 = arith.constant 4 : i32
    %40 = vector.broadcast %c4_i32 : i32 to vector<24x4xi32>
    %41 = arith.select %39, %37, %40 : vector<24x4xi1>, vector<24x4xi32>
    %cst_21 = arith.constant dense<2147483647> : vector<24xi32>
    %42 = vector.multi_reduction <minsi>, %41, %cst_21 [1] : vector<24x4xi32> to vector<24xi32>
    %43 = vector.shape_cast %42 : vector<24xi32> to vector<24x1xi32>
    %44 = arith.sitofp %43 : vector<24x1xi32> to vector<24x1xf32>
    %cst_22 = arith.constant 0.000000e+00 : f32
    %45 = vector.broadcast %cst_22 : f32 to vector<24x3xf32>
    %46 = tpu.concatenate %20, %25, %28, %30, %32, %34, %44, %45 in 1 : vector<24x4xf32>, vector<24x4xf32>, vector<24x1xf32>, vector<24x1xf32>, vector<24x1xf32>, vector<24x1xf32>, vector<24x1xf32>, vector<24x3xf32> -> vector<24x16xf32>
    %c0_23 = arith.constant 0 : index
    %c0_24 = arith.constant 0 : index
    %47 = vector.load %arg8[%c0_23, %c0_24] : memref<24x16xf32, #tpu.memory_space<vmem>>, vector<24x16xf32>
    tpu.vector_store %arg8[%c0_23, %c0_24], %46 {strides = array<i32>} : memref<24x16xf32, #tpu.memory_space<vmem>>, vector<24x16xf32>,
    return
  }
  func.func @transform_0(%arg0: i32) -> (i32, i32) {
    %c0_i32 = arith.constant 0 : i32
    %c0_i32_0 = arith.constant 0 : i32
    %c0_i32_1 = arith.constant 0 : i32
    return %c0_i32, %c0_i32_0 : i32, i32
  }
  func.func @transform_1(%arg0: i32) -> (i32, i32) {
    %c0_i32 = arith.constant 0 : i32
    %c0_i32_0 = arith.constant 0 : i32
    %c0_i32_1 = arith.constant 0 : i32
    return %c0_i32, %c0_i32_0 : i32, i32
  }
  func.func @transform_2(%arg0: i32) -> (i32, i32) {
    %c0_i32 = arith.constant 0 : i32
    %c0_i32_0 = arith.constant 0 : i32
    %c0_i32_1 = arith.constant 0 : i32
    return %c0_i32, %c0_i32_0 : i32, i32
  }
  func.func @transform_3(%arg0: i32) -> (i32, i32) {
    %c0_i32 = arith.constant 0 : i32
    %c0_i32_0 = arith.constant 0 : i32
    %c0_i32_1 = arith.constant 0 : i32
    return %c0_i32, %c0_i32_0 : i32, i32
  }
  func.func @transform_4(%arg0: i32) -> (i32, i32) {
    %c0_i32 = arith.constant 0 : i32
    %c0_i32_0 = arith.constant 0 : i32
    %c0_i32_1 = arith.constant 0 : i32
    return %c0_i32, %c0_i32_0 : i32, i32
  }
  func.func @transform_5(%arg0: i32) -> (i32, i32) {
    %c0_i32 = arith.constant 0 : i32
    %c0_i32_0 = arith.constant 0 : i32
    %c0_i32_1 = arith.constant 0 : i32
    return %c0_i32, %c0_i32_0 : i32, i32
  }
  func.func @transform_6(%arg0: i32) -> (i32, i32) {
    %c0_i32 = arith.constant 0 : i32
    %c0_i32_0 = arith.constant 0 : i32
    %c0_i32_1 = arith.constant 0 : i32
    return %c0_i32, %c0_i32_0 : i32, i32
  }
  func.func @transform_7(%arg0: i32) -> (i32, i32) {
    %c0_i32 = arith.constant 0 : i32
    %c0_i32_0 = arith.constant 0 : i32
    %c0_i32_1 = arith.constant 0 : i32
    return %c0_i32, %c0_i32_0 : i32, i32
  }
}

</mosaic_0001>

<llo_original>
// kernel: gcn_survival_forward.1
$region0: #{gcn_survival_forward.1}
  #allocation0 [shape = 'u32[]', space=smem, size = 0x4, offset = 0x4, fixed_abs, tag = 'smem constant byte address 0x4 - core index']
  #allocation1 [shape = 'u32[144,128]{1,0:T(1,128)}', space=vmem, size = 0x12000, scoped, tag = 'internal scratch']
  %s0 = inlined_call_operand.hbm [shape: f32[24,24], index: 0, kind: input, shape index: {}]
  %s1 = inlined_call_operand.hbm [shape: f32[24,64], index: 1, kind: input, shape index: {}]
  %s2 = inlined_call_operand.hbm [shape: f32[1,64], index: 2, kind: input, shape index: {}]
  %s3 = inlined_call_operand.hbm [shape: f32[64,64], index: 3, kind: input, shape index: {}]
  %s4 = inlined_call_operand.hbm [shape: f32[1,64], index: 4, kind: input, shape index: {}]
  %s5 = inlined_call_operand.hbm [shape: f32[64,4], index: 5, kind: input, shape index: {}]
  %s6 = inlined_call_operand.hbm [shape: f32[1,4], index: 6, kind: input, shape index: {}]
  %s7 = inlined_call_operand.hbm [shape: f32[24,16], index: 7, kind: output, shape index: {}]
  %s8 = sld [smem:[#allocation0]]
  $region66: #{gcn_survival_forward.1} parent=0
    _
  %s10 = ssub.s32 1, %s8
  %s11 = scalar_select 0, %s10, %s8
  $region1: #{gcn_survival_forward.1} parent=0
    #allocation2 [shape = 'u8[12288]{0}', space=vmem, size = 0x3000, scoped, tag = 'input window, operand 0, single buffered']
    #allocation3 [shape = 's32[1]{0}', space=sflag, size = 0x4, scoped, tag = 'scoped memory for gcn_survival_forward.1']
    #allocation4 [shape = 's32[1]{0}', space=sflag, size = 0x4, scoped, tag = 'scoped memory for gcn_survival_forward.1']
    #allocation5 [shape = 'u8[12288]{0}', space=vmem, size = 0x3000, scoped, tag = 'input window, operand 1, single buffered']
    #allocation6 [shape = 's32[1]{0}', space=sflag, size = 0x4, scoped, tag = 'scoped memory for gcn_survival_forward.1']
    #allocation7 [shape = 'u8[512]{0}', space=vmem, size = 0x400, scoped, tag = 'input window, operand 2, single buffered']
    #allocation8 [shape = 'u8[32768]{0}', space=vmem, size = 0x8000, scoped, tag = 'input window, operand 3, single buffered']
    #allocation9 [shape = 's32[1]{0}', space=sflag, size = 0x4, scoped, tag = 'scoped memory for gcn_survival_forward.1']
    #allocation10 [shape = 'u8[512]{0}', space=vmem, size = 0x400, scoped, tag = 'input window, operand 4, single buffered']
    #allocation11 [shape = 'u8[32768]{0}', space=vmem, size = 0x8000, scoped, tag = 'input window, operand 5, single buffered']
    #allocation12 [shape = 's32[1]{0}', space=sflag, size = 0x4, scoped, tag = 'scoped memory for gcn_survival_forward.1']
    #allocation13 [shape = 'u8[512]{0}', space=vmem, size = 0x400, scoped, tag = 'input window, operand 6, single buffered']
    #allocation14 [shape = 'u8[12288]{0}', space=vmem, size = 0x3000, scoped, tag = 'output window, operand 0, single buffered']
    %12 = vsyncpa [#allocation3], 0
    %13 = vsyncpa [#allocation6], 0
    %14 = vsyncpa [#allocation9], 0
    %15 = vsyncpa [#allocation12], 0
    %16 = vsyncpa [#allocation4], 0
    // Predicated region
    $region2: #{gcn_survival_forward.1} parent=1 // pred_check
      _
    $region3: #{gcn_survival_forward.1} parent=1 // pred_check_branch
      %18 = sbr.rel (0) target = $region5
    $region4: #{gcn_survival_forward.1} parent=1 // pred_region
      %s20 = ssub.s32 384, 384
      %21 = vsyncadd [#allocation3], %s20
      %s22 = sshll.u32 [#allocation2], 4
      %s23 = int_to_ptr.vmem [resolvable:$true] %s22
      %28 = dma.hbm_to_vmem [thread:$0]  %s0, 384, %s23, [#allocation3], 128, 128, 8
    $region5: #{gcn_survival_forward.1} parent=1 // pred_fallthru
      _
    // Predicated region
    $region6: #{gcn_survival_forward.1} parent=1 // pred_check
      _
    $region7: #{gcn_survival_forward.1} parent=1 // pred_check_branch
      %30 = sbr.rel (0) target = $region9
    $region8: #{gcn_survival_forward.1} parent=1 // pred_region
      %s32 = ssub.s32 384, 384
      %33 = vsyncadd [#allocation6], %s32
      %s34 = sshll.u32 [#allocation5], 4
      %s35 = int_to_ptr.vmem [resolvable:$true] %s34
      %40 = dma.hbm_to_vmem [thread:$0]  %s1, 384, %s35, [#allocation6], 128, 128, 8
    $region9: #{gcn_survival_forward.1} parent=1 // pred_fallthru
      _
    // Predicated region
    $region10: #{gcn_survival_forward.1} parent=1 // pred_check
      _
    $region11: #{gcn_survival_forward.1} parent=1 // pred_check_branch
      %42 = sbr.rel (0) target = $region13
    $region12: #{gcn_survival_forward.1} parent=1 // pred_region
      %s44 = ssub.s32 16, 16
      %45 = vsyncadd [#allocation6], %s44
      %s47 = sshll.u32 [#allocation7], 4
      %s48 = int_to_ptr.vmem [resolvable:$true] %s47
      %50 = dma.hbm_to_vmem [thread:$0]  %s2, 16, %s48, [#allocation6]
    $region13: #{gcn_survival_forward.1} parent=1 // pred_fallthru
      _
    // Predicated region
    $region14: #{gcn_survival_forward.1} parent=1 // pred_check
      _
    $region15: #{gcn_survival_forward.1} parent=1 // pred_check_branch
      %52 = sbr.rel (0) target = $region17
    $region16: #{gcn_survival_forward.1} parent=1 // pred_region
      %s54 = ssub.s32 1024, 1024
      %55 = vsyncadd [#allocation9], %s54
      %s56 = sshll.u32 [#allocation8], 4
      %s57 = int_to_ptr.vmem [resolvable:$true] %s56
      %62 = dma.hbm_to_vmem [thread:$0]  %s3, 1024, %s57, [#allocation9], 128, 128, 8
    $region17: #{gcn_survival_forward.1} parent=1 // pred_fallthru
      _
    // Predicated region
    $region18: #{gcn_survival_forward.1} parent=1 // pred_check
      _
    $region19: #{gcn_survival_forward.1} parent=1 // pred_check_branch
      %64 = sbr.rel (0) target = $region21
    $region20: #{gcn_survival_forward.1} parent=1 // pred_region
      %s66 = ssub.s32 16, 16
      %67 = vsyncadd [#allocation9], %s66
      %s69 = sshll.u32 [#allocation10], 4
      %s70 = int_to_ptr.vmem [resolvable:$true] %s69
      %72 = dma.hbm_to_vmem [thread:$0]  %s4, 16, %s70, [#allocation9]
    $region21: #{gcn_survival_forward.1} parent=1 // pred_fallthru
      _
    // Predicated region
    $region22: #{gcn_survival_forward.1} parent=1 // pred_check
      _
    $region23: #{gcn_survival_forward.1} parent=1 // pred_check_branch
      %74 = sbr.rel (0) target = $region25
    $region24: #{gcn_survival_forward.1} parent=1 // pred_region
      %s76 = ssub.s32 1024, 1024
      %77 = vsyncadd [#allocation12], %s76
      %s78 = sshll.u32 [#allocation11], 4
      %s79 = int_to_ptr.vmem [resolvable:$true] %s78
      %84 = dma.hbm_to_vmem [thread:$0]  %s5, 1024, %s79, [#allocation12], 128, 128, 8
    $region25: #{gcn_survival_forward.1} parent=1 // pred_fallthru
      _
    // Predicated region
    $region26: #{gcn_survival_forward.1} parent=1 // pred_check
      _
    $region27: #{gcn_survival_forward.1} parent=1 // pred_check_branch
      %86 = sbr.rel (0) target = $region29
    $region28: #{gcn_survival_forward.1} parent=1 // pred_region
      %s88 = ssub.s32 16, 16
      %89 = vsyncadd [#allocation12], %s88
      %s91 = sshll.u32 [#allocation13], 4
      %s92 = int_to_ptr.vmem [resolvable:$true] %s91
      %94 = dma.hbm_to_vmem [thread:$0]  %s6, 16, %s92, [#allocation12]
    $region29: #{gcn_survival_forward.1} parent=1 // pred_fallthru
      _
    // Predicated region
    $region30: #{gcn_survival_forward.1} parent=1 // pred_check
      _
    $region31: #{gcn_survival_forward.1} parent=1 // pred_check_branch
      %96 = sbr.rel (0) target = $region33
    $region32: #{gcn_survival_forward.1} parent=1 // pred_region
      %97 = dma.done [#allocation3], 384
    $region33: #{gcn_survival_forward.1} parent=1 // pred_fallthru
      _
    // Predicated region
    $region34: #{gcn_survival_forward.1} parent=1 // pred_check
      _
    $region35: #{gcn_survival_forward.1} parent=1 // pred_check_branch
      %99 = sbr.rel (0) target = $region37
    $region36: #{gcn_survival_forward.1} parent=1 // pred_region
      %100 = dma.done [#allocation6], 384
    $region37: #{gcn_survival_forward.1} parent=1 // pred_fallthru
      _
    // Predicated region
    $region38: #{gcn_survival_forward.1} parent=1 // pred_check
      _
    $region39: #{gcn_survival_forward.1} parent=1 // pred_check_branch
      %102 = sbr.rel (0) target = $region41
    $region40: #{gcn_survival_forward.1} parent=1 // pred_region
      %103 = dma.done [#allocation6], 16
    $region41: #{gcn_survival_forward.1} parent=1 // pred_fallthru
      _
    // Predicated region
    $region42: #{gcn_survival_forward.1} parent=1 // pred_check
      _
    $region43: #{gcn_survival_forward.1} parent=1 // pred_check_branch
      %105 = sbr.rel (0) target = $region45
    $region44: #{gcn_survival_forward.1} parent=1 // pred_region
      %106 = dma.done [#allocation9], 1024
    $region45: #{gcn_survival_forward.1} parent=1 // pred_fallthru
      _
    // Predicated region
    $region46: #{gcn_survival_forward.1} parent=1 // pred_check
      _
    $region47: #{gcn_survival_forward.1} parent=1 // pred_check_branch
      %108 = sbr.rel (0) target = $region49
    $region48: #{gcn_survival_forward.1} parent=1 // pred_region
      %109 = dma.done [#allocation9], 16
    $region49: #{gcn_survival_forward.1} parent=1 // pred_fallthru
      _
    // Predicated region
    $region50: #{gcn_survival_forward.1} parent=1 // pred_check
      _
    $region51: #{gcn_survival_forward.1} parent=1 // pred_check_branch
      %111 = sbr.rel (0) target = $region53
    $region52: #{gcn_survival_forward.1} parent=1 // pred_region
      %112 = dma.done [#allocation12], 1024
    $region53: #{gcn_survival_forward.1} parent=1 // pred_fallthru
      _
    // Predicated region
    $region54: #{gcn_survival_forward.1} parent=1 // pred_check
      _
    $region55: #{gcn_survival_forward.1} parent=1 // pred_check_branch
      %114 = sbr.rel (0) target = $region57
    $region56: #{gcn_survival_forward.1} parent=1 // pred_region
      %115 = dma.done [#allocation12], 16
    $region57: #{gcn_survival_forward.1} parent=1 // pred_fallthru
      _
    %v116 = vld [vmem:[#allocation2] sm:$0xff]
    %v117 = vld [vmem:[#allocation2 + $0x8] sm:$0xff]
    %v118 = vld [vmem:[#allocation2 + $0x10] sm:$0xff]
    %v119 = vld [vmem:[#allocation5] sm:$0xff]
    %v120 = vld [vmem:[#allocation5 + $0x8] sm:$0xff]
    %v121 = vld [vmem:[#allocation5 + $0x10] sm:$0xff]
    %v122 = vld [vmem:[#allocation7] sm:$0x1]
    %v124 = vlaneseq
    %v125 = vshrl.u32 %v124, 7
    %v126 = vsub.s32 0, %v125
    %v127 = vrot.slane %v122, %v126
    %vm129 = vcmask 195584
    %v131 = vsel %vm129, %v116, 0
    %v134 = vsel %vm129, %v117, 0
    %v137 = vsel %vm129, %v118, 0
    %139 = vmatprep.subr.mxu0 0.0
    %140 = vmatpush1.msra.mxu0 %v119
    %141 = vmatprep.subr.mxu0 0.0
    %142 = vmatpush1.msra.mxu0 %v120
    %143 = vmatprep.subr.mxu0 0.0
    %144 = vmatpush1.msra.mxu0 %v121
    %145 = vmatprep.subr.mxu0 0.0
    %146 = vmatpush1.msra.mxu0 0.0
    %147 = vmatprep.subr.mxu0 0.0
    %148 = vmatpush1.msra.mxu0 0.0
    %149 = vmatprep.subr.mxu0 0.0
    %150 = vmatpush1.msra.mxu0 0.0
    %151 = vmatprep.subr.mxu0 0.0
    %152 = vmatpush1.msra.mxu0 0.0
    %153 = vmatprep.subr.mxu0 0.0
    %154 = vmatpush1.msra.mxu0 0.0
    %155 = vmatprep.subr.mxu0 0.0
    %156 = vmatpush1.msra.mxu0 0.0
    %157 = vmatprep.subr.mxu0 0.0
    %158 = vmatpush1.msra.mxu0 0.0
    %159 = vmatprep.subr.mxu0 0.0
    %160 = vmatpush1.msra.mxu0 0.0
    %161 = vmatprep.subr.mxu0 0.0
    %162 = vmatpush1.msra.mxu0 0.0
    %163 = vmatprep.subr.mxu0 0.0
    %164 = vmatpush1.msra.mxu0 0.0
    %165 = vmatprep.subr.mxu0 0.0
    %166 = vmatpush1.msra.mxu0 0.0
    %167 = vmatprep.subr.mxu0 0.0
    %168 = vmatpush1.msra.mxu0 0.0
    %169 = vmatprep.subr.mxu0 0.0
    %170 = vmatpush1.msra.mxu0 0.0
    %171 = vmatprep.subr.mxu0 0.0
    %172 = vmatpush1.msra.mxu0 0.0
    %173 = vmatprep.subr.mxu0 0.0
    %174 = vmatpush1.msra.mxu0 0.0
    %175 = vmatprep.subr.mxu0 0.0
    %176 = vmatpush1.msra.mxu0 0.0
    %177 = vmatprep.subr.mxu0 0.0
    %178 = vmatpush1.msra.mxu0 0.0
    %179 = vmatprep.subr.mxu0 0.0
    %180 = vmatpush1.msra.mxu0 0.0
    %181 = vmatprep.subr.mxu0 0.0
    %182 = vmatpush1.msra.mxu0 0.0
    %183 = vmatprep.subr.mxu0 0.0
    %184 = vmatpush1.msra.mxu0 0.0
    %185 = vmatprep.subr.mxu0 0.0
    %186 = vmatpush1.msra.mxu0 0.0
    %187 = vmatprep.subr.mxu0 0.0
    %188 = vmatpush1.msra.mxu0 0.0
    %189 = vmatprep.subr.mxu0 0.0
    %190 = vmatpush1.msra.mxu0 0.0
    %191 = vmatprep.subr.mxu0 0.0
    %192 = vmatpush1.msra.mxu0 0.0
    %193 = vmatprep.subr.mxu0 0.0
    %194 = vmatpush1.msra.mxu0 0.0
    %195 = vmatprep.subr.mxu0 0.0
    %196 = vmatpush1.msra.mxu0 0.0
    %197 = vmatprep.subr.mxu0 0.0
    %198 = vmatpush1.msra.mxu0 0.0
    %199 = vmatprep.subr.mxu0 0.0
    %200 = vmatpush1.msra.mxu0 0.0
    %201 = vmatprep.subr.mxu0 0.0
    %202 = vmatpush1.msra.mxu0 0.0
    %203 = vmatprep.mubr.f32.mxu0 0.0
    %204 = vmatmul.mubr.f32.gmra.mrb[0].mxu0 %v131
    %v205 = vpop.f32.mrb[0].mxu0
    %v206 = vadd.f32 %v127, %v205
    %v207 = vpop.f32.mrb[0].mxu0
    %208 = vmatprep.mubr.f32.mxu0 0.0
    %209 = vmatmul.mubr.f32.gmra.mrb[0].mxu0 %v134
    %v210 = vpop.f32.mrb[0].mxu0
    %v211 = vadd.f32 %v127, %v210
    %v212 = vpop.f32.mrb[0].mxu0
    %213 = vmatprep.mubr.f32.mxu0 0.0
    %214 = vmatmul.mubr.f32.gmra.mrb[0].mxu0 %v137
    %v215 = vpop.f32.mrb[0].mxu0
    %v216 = vadd.f32 %v127, %v215
    %v217 = vpop.f32.mrb[0].mxu0
    %218 = vdwg.mxu0
    %v219 = vmax.f32 %v206, 0.0
    %v220 = vmax.f32 %v211, 0.0
    %v221 = vmax.f32 %v216, 0.0
    %v222 = vld [vmem:[#allocation8] sm:$0xff]
    %v223 = vld [vmem:[#allocation8 + $0x8] sm:$0xff]
    %v224 = vld [vmem:[#allocation8 + $0x10] sm:$0xff]
    %v225 = vld [vmem:[#allocation8 + $0x18] sm:$0xff]
    %v226 = vld [vmem:[#allocation8 + $0x20] sm:$0xff]
    %v227 = vld [vmem:[#allocation8 + $0x28] sm:$0xff]
    %v228 = vld [vmem:[#allocation8 + $0x30] sm:$0xff]
    %v229 = vld [vmem:[#allocation8 + $0x38] sm:$0xff]
    %vm230 = vcmask 523264
    %v232 = vsel %vm230, %v219, 0
    %v235 = vsel %vm230, %v220, 0
    %v238 = vsel %vm230, %v221, 0
    %240 = vmatprep.subr.mxu0 0.0
    %241 = vmatpush1.msra.mxu0 %v222
    %242 = vmatprep.subr.mxu0 0.0
    %243 = vmatpush1.msra.mxu0 %v223
    %244 = vmatprep.subr.mxu0 0.0
    %245 = vmatpush1.msra.mxu0 %v224
    %246 = vmatprep.subr.mxu0 0.0
    %247 = vmatpush1.msra.mxu0 %v225
    %248 = vmatprep.subr.mxu0 0.0
    %249 = vmatpush1.msra.mxu0 %v226
    %250 = vmatprep.subr.mxu0 0.0
    %251 = vmatpush1.msra.mxu0 %v227
    %252 = vmatprep.subr.mxu0 0.0
    %253 = vmatpush1.msra.mxu0 %v228
    %254 = vmatprep.subr.mxu0 0.0
    %255 = vmatpush1.msra.mxu0 %v229
    %256 = vmatprep.subr.mxu0 0.0
    %257 = vmatpush1.msra.mxu0 0.0
    %258 = vmatprep.subr.mxu0 0.0
    %259 = vmatpush1.msra.mxu0 0.0
    %260 = vmatprep.subr.mxu0 0.0
    %261 = vmatpush1.msra.mxu0 0.0
    %262 = vmatprep.subr.mxu0 0.0
    %263 = vmatpush1.msra.mxu0 0.0
    %264 = vmatprep.subr.mxu0 0.0
    %265 = vmatpush1.msra.mxu0 0.0
    %266 = vmatprep.subr.mxu0 0.0
    %267 = vmatpush1.msra.mxu0 0.0
    %268 = vmatprep.subr.mxu0 0.0
    %269 = vmatpush1.msra.mxu0 0.0
    %270 = vmatprep.subr.mxu0 0.0
    %271 = vmatpush1.msra.mxu0 0.0
    %272 = vmatprep.subr.mxu0 0.0
    %273 = vmatpush1.msra.mxu0 0.0
    %274 = vmatprep.subr.mxu0 0.0
    %275 = vmatpush1.msra.mxu0 0.0
    %276 = vmatprep.subr.mxu0 0.0
    %277 = vmatpush1.msra.mxu0 0.0
    %278 = vmatprep.subr.mxu0 0.0
    %279 = vmatpush1.msra.mxu0 0.0
    %280 = vmatprep.subr.mxu0 0.0
    %281 = vmatpush1.msra.mxu0 0.0
    %282 = vmatprep.subr.mxu0 0.0
    %283 = vmatpush1.msra.mxu0 0.0
    %284 = vmatprep.subr.mxu0 0.0
    %285 = vmatpush1.msra.mxu0 0.0
    %286 = vmatprep.subr.mxu0 0.0
    %287 = vmatpush1.msra.mxu0 0.0
    %288 = vmatprep.subr.mxu0 0.0
    %289 = vmatpush1.msra.mxu0 0.0
    %290 = vmatprep.subr.mxu0 0.0
    %291 = vmatpush1.msra.mxu0 0.0
    %292 = vmatprep.subr.mxu0 0.0
    %293 = vmatpush1.msra.mxu0 0.0
    %294 = vmatprep.subr.mxu0 0.0
    %295 = vmatpush1.msra.mxu0 0.0
    %296 = vmatprep.subr.mxu0 0.0
    %297 = vmatpush1.msra.mxu0 0.0
    %298 = vmatprep.subr.mxu0 0.0
    %299 = vmatpush1.msra.mxu0 0.0
    %300 = vmatprep.subr.mxu0 0.0
    %301 = vmatpush1.msra.mxu0 0.0
    %302 = vmatprep.subr.mxu0 0.0
    %303 = vmatpush1.msra.mxu0 0.0
    %304 = vmatprep.mubr.f32.mxu0 0.0
    %305 = vmatmul.mubr.f32.gmra.mrb[0].mxu0 %v232
    %v306 = vpop.f32.mrb[0].mxu0
    %v307 = vadd.f32 0.0, %v306
    %v308 = vpop.f32.mrb[0].mxu0
    %309 = vmatprep.mubr.f32.mxu0 0.0
    %310 = vmatmul.mubr.f32.gmra.mrb[0].mxu0 %v235
    %v311 = vpop.f32.mrb[0].mxu0
    %v312 = vadd.f32 0.0, %v311
    %v313 = vpop.f32.mrb[0].mxu0
    %314 = vmatprep.mubr.f32.mxu0 0.0
    %315 = vmatmul.mubr.f32.gmra.mrb[0].mxu0 %v238
    %v316 = vpop.f32.mrb[0].mxu0
    %v317 = vadd.f32 0.0, %v316
    %v318 = vpop.f32.mrb[0].mxu0
    %319 = vdwg.mxu0
    %v320 = vld [vmem:[#allocation10] sm:$0x1]
    %v322 = vlaneseq
    %v323 = vshrl.u32 %v322, 7
    %v324 = vsub.s32 0, %v323
    %v325 = vrot.slane %v320, %v324
    %327 = vmatprep.subr.mxu0 0.0
    %328 = vmatpush1.msra.mxu0 %v307
    %329 = vmatprep.subr.mxu0 0.0
    %330 = vmatpush1.msra.mxu0 %v312
    %331 = vmatprep.subr.mxu0 0.0
    %332 = vmatpush1.msra.mxu0 %v317
    %333 = vmatprep.subr.mxu0 0.0
    %334 = vmatpush1.msra.mxu0 0.0
    %335 = vmatprep.subr.mxu0 0.0
    %336 = vmatpush1.msra.mxu0 0.0
    %337 = vmatprep.subr.mxu0 0.0
    %338 = vmatpush1.msra.mxu0 0.0
    %339 = vmatprep.subr.mxu0 0.0
    %340 = vmatpush1.msra.mxu0 0.0
    %341 = vmatprep.subr.mxu0 0.0
    %342 = vmatpush1.msra.mxu0 0.0
    %343 = vmatprep.subr.mxu0 0.0
    %344 = vmatpush1.msra.mxu0 0.0
    %345 = vmatprep.subr.mxu0 0.0
    %346 = vmatpush1.msra.mxu0 0.0
    %347 = vmatprep.subr.mxu0 0.0
    %348 = vmatpush1.msra.mxu0 0.0
    %349 = vmatprep.subr.mxu0 0.0
    %350 = vmatpush1.msra.mxu0 0.0
    %351 = vmatprep.subr.mxu0 0.0
    %352 = vmatpush1.msra.mxu0 0.0
    %353 = vmatprep.subr.mxu0 0.0
    %354 = vmatpush1.msra.mxu0 0.0
    %355 = vmatprep.subr.mxu0 0.0
    %356 = vmatpush1.msra.mxu0 0.0
    %357 = vmatprep.subr.mxu0 0.0
    %358 = vmatpush1.msra.mxu0 0.0
    %359 = vmatprep.subr.mxu0 0.0
    %360 = vmatpush1.msra.mxu0 0.0
    %361 = vmatprep.subr.mxu0 0.0
    %362 = vmatpush1.msra.mxu0 0.0
    %363 = vmatprep.subr.mxu0 0.0
    %364 = vmatpush1.msra.mxu0 0.0
    %365 = vmatprep.subr.mxu0 0.0
    %366 = vmatpush1.msra.mxu0 0.0
    %367 = vmatprep.subr.mxu0 0.0
    %368 = vmatpush1.msra.mxu0 0.0
    %369 = vmatprep.subr.mxu0 0.0
    %370 = vmatpush1.msra.mxu0 0.0
    %371 = vmatprep.subr.mxu0 0.0
    %372 = vmatpush1.msra.mxu0 0.0
    %373 = vmatprep.subr.mxu0 0.0
    %374 = vmatpush1.msra.mxu0 0.0
    %375 = vmatprep.subr.mxu0 0.0
    %376 = vmatpush1.msra.mxu0 0.0
    %377 = vmatprep.subr.mxu0 0.0
    %378 = vmatpush1.msra.mxu0 0.0
    %379 = vmatprep.subr.mxu0 0.0
    %380 = vmatpush1.msra.mxu0 0.0
    %381 = vmatprep.subr.mxu0 0.0
    %382 = vmatpush1.msra.mxu0 0.0
    %383 = vmatprep.subr.mxu0 0.0
    %384 = vmatpush1.msra.mxu0 0.0
    %385 = vmatprep.subr.mxu0 0.0
    %386 = vmatpush1.msra.mxu0 0.0
    %387 = vmatprep.subr.mxu0 0.0
    %388 = vmatpush1.msra.mxu0 0.0
    %389 = vmatprep.subr.mxu0 0.0
    %390 = vmatpush1.msra.mxu0 0.0
    %391 = vmatprep.mubr.f32.mxu0 0.0
    %392 = vmatmul.mubr.f32.gmra.mrb[0].mxu0 %v131
    %v393 = vpop.f32.mrb[0].mxu0
    %v394 = vadd.f32 %v325, %v393
    %v395 = vpop.f32.mrb[0].mxu0
    %396 = vmatprep.mubr.f32.mxu0 0.0
    %397 = vmatmul.mubr.f32.gmra.mrb[0].mxu0 %v134
    %v398 = vpop.f32.mrb[0].mxu0
    %v399 = vadd.f32 %v325, %v398
    %v400 = vpop.f32.mrb[0].mxu0
    %401 = vmatprep.mubr.f32.mxu0 0.0
    %402 = vmatmul.mubr.f32.gmra.mrb[0].mxu0 %v137
    %v403 = vpop.f32.mrb[0].mxu0
    %v404 = vadd.f32 %v325, %v403
    %v405 = vpop.f32.mrb[0].mxu0
    %406 = vdwg.mxu0
    %v407 = vmax.f32 %v394, 0.0
    %v408 = vmax.f32 %v399, 0.0
    %v409 = vmax.f32 %v404, 0.0
    %v410 = vld [vmem:[#allocation11] sm:$0xff]
    %v411 = vld [vmem:[#allocation11 + $0x8] sm:$0xff]
    %v412 = vld [vmem:[#allocation11 + $0x10] sm:$0xff]
    %v413 = vld [vmem:[#allocation11 + $0x18] sm:$0xff]
    %v414 = vld [vmem:[#allocation11 + $0x20] sm:$0xff]
    %v415 = vld [vmem:[#allocation11 + $0x28] sm:$0xff]
    %v416 = vld [vmem:[#allocation11 + $0x30] sm:$0xff]
    %v417 = vld [vmem:[#allocation11 + $0x38] sm:$0xff]
    %v418 = vld [vmem:[#allocation13] sm:$0x1]
    %v420 = vlaneseq
    %v421 = vshrl.u32 %v420, 7
    %v422 = vsub.s32 0, %v421
    %v423 = vrot.slane %v418, %v422
    %v426 = vsel %vm230, %v407, 0
    %v429 = vsel %vm230, %v408, 0
    %v432 = vsel %vm230, %v409, 0
    %434 = vmatprep.subr.mxu0 0.0
    %435 = vmatpush1.msra.mxu0 %v410
    %436 = vmatprep.subr.mxu0 0.0
    %437 = vmatpush1.msra.mxu0 %v411
    %438 = vmatprep.subr.mxu0 0.0
    %439 = vmatpush1.msra.mxu0 %v412
    %440 = vmatprep.subr.mxu0 0.0
    %441 = vmatpush1.msra.mxu0 %v413
    %442 = vmatprep.subr.mxu0 0.0
    %443 = vmatpush1.msra.mxu0 %v414
    %444 = vmatprep.subr.mxu0 0.0
    %445 = vmatpush1.msra.mxu0 %v415
    %446 = vmatprep.subr.mxu0 0.0
    %447 = vmatpush1.msra.mxu0 %v416
    %448 = vmatprep.subr.mxu0 0.0
    %449 = vmatpush1.msra.mxu0 %v417
    %450 = vmatprep.subr.mxu0 0.0
    %451 = vmatpush1.msra.mxu0 0.0
    %452 = vmatprep.subr.mxu0 0.0
    %453 = vmatpush1.msra.mxu0 0.0
    %454 = vmatprep.subr.mxu0 0.0
    %455 = vmatpush1.msra.mxu0 0.0
    %456 = vmatprep.subr.mxu0 0.0
    %457 = vmatpush1.msra.mxu0 0.0
    %458 = vmatprep.subr.mxu0 0.0
    %459 = vmatpush1.msra.mxu0 0.0
    %460 = vmatprep.subr.mxu0 0.0
    %461 = vmatpush1.msra.mxu0 0.0
    %462 = vmatprep.subr.mxu0 0.0
    %463 = vmatpush1.msra.mxu0 0.0
    %464 = vmatprep.subr.mxu0 0.0
    %465 = vmatpush1.msra.mxu0 0.0
    %466 = vmatprep.subr.mxu0 0.0
    %467 = vmatpush1.msra.mxu0 0.0
    %468 = vmatprep.subr.mxu0 0.0
    %469 = vmatpush1.msra.mxu0 0.0
    %470 = vmatprep.subr.mxu0 0.0
    %471 = vmatpush1.msra.mxu0 0.0
    %472 = vmatprep.subr.mxu0 0.0
    %473 = vmatpush1.msra.mxu0 0.0
    %474 = vmatprep.subr.mxu0 0.0
    %475 = vmatpush1.msra.mxu0 0.0
    %476 = vmatprep.subr.mxu0 0.0
    %477 = vmatpush1.msra.mxu0 0.0
    %478 = vmatprep.subr.mxu0 0.0
    %479 = vmatpush1.msra.mxu0 0.0
    %480 = vmatprep.subr.mxu0 0.0
    %481 = vmatpush1.msra.mxu0 0.0
    %482 = vmatprep.subr.mxu0 0.0
    %483 = vmatpush1.msra.mxu0 0.0
    %484 = vmatprep.subr.mxu0 0.0
    %485 = vmatpush1.msra.mxu0 0.0
    %486 = vmatprep.subr.mxu0 0.0
    %487 = vmatpush1.msra.mxu0 0.0
    %488 = vmatprep.subr.mxu0 0.0
    %489 = vmatpush1.msra.mxu0 0.0
    %490 = vmatprep.subr.mxu0 0.0
    %491 = vmatpush1.msra.mxu0 0.0
    %492 = vmatprep.subr.mxu0 0.0
    %493 = vmatpush1.msra.mxu0 0.0
    %494 = vmatprep.subr.mxu0 0.0
    %495 = vmatpush1.msra.mxu0 0.0
    %496 = vmatprep.subr.mxu0 0.0
    %497 = vmatpush1.msra.mxu0 0.0
    %498 = vmatprep.mubr.f32.mxu0 0.0
    %499 = vmatmul.mubr.f32.gmra.mrb[0].mxu0 %v426
    %v500 = vpop.f32.mrb[0].mxu0
    %v501 = vadd.f32 %v423, %v500
    %v502 = vpop.f32.mrb[0].mxu0
    %503 = vmatprep.mubr.f32.mxu0 0.0
    %504 = vmatmul.mubr.f32.gmra.mrb[0].mxu0 %v429
    %v505 = vpop.f32.mrb[0].mxu0
    %v506 = vadd.f32 %v423, %v505
    %v507 = vpop.f32.mrb[0].mxu0
    %508 = vmatprep.mubr.f32.mxu0 0.0
    %509 = vmatmul.mubr.f32.gmra.mrb[0].mxu0 %v432
    %v510 = vpop.f32.mrb[0].mxu0
    %v511 = vadd.f32 %v423, %v510
    %v512 = vpop.f32.mrb[0].mxu0
    %513 = vdwg.mxu0
    %v514 = vxor.u32 %v501, 2147483648
    %v515 = vxor.u32 %v506, 2147483648
    %v516 = vxor.u32 %v511, 2147483648
    %v517 = vmul.f32 %v514, 1.442695
    %v518 = vpow.pop %v517
    %v519 = vmul.f32 %v515, 1.442695
    %v520 = vpow.pop %v519
    %v521 = vmul.f32 %v516, 1.442695
    %v522 = vpow.pop %v521
    %v523 = vadd.f32 %v518, 1.0
    %v524 = vadd.f32 %v520, 1.0
    %v525 = vadd.f32 %v522, 1.0
    %v526 = vrcp.pop %v523
    %v527 = vmul.f32 1.0, %v526
    %v528 = vrcp.pop %v524
    %v529 = vmul.f32 1.0, %v528
    %v530 = vrcp.pop %v525
    %v531 = vmul.f32 1.0, %v530
    %v532 = vsub.f32 1.0, %v527
    %v533 = vsub.f32 1.0, %v529
    %v534 = vsub.f32 1.0, %v531
    %538 = vrot.lane.b32.xlu0 %v532, 127
    %v539 = vpop.permute.xlu0 %538
    %540 = vrot.lane.b32.xlu0 %v533, 127
    %v541 = vpop.permute.xlu0 %540
    %542 = vrot.lane.b32.xlu0 %v534, 127
    %v543 = vpop.permute.xlu0 %542
    %v547 = vmul.f32 %v532, %v539
    %v548 = vmul.f32 %v533, %v541
    %v549 = vmul.f32 %v534, %v543
    %550 = vrot.lane.b32.xlu0 %v532, 126
    %v551 = vpop.permute.xlu0 %550
    %552 = vrot.lane.b32.xlu0 %v533, 126
    %v553 = vpop.permute.xlu0 %552
    %554 = vrot.lane.b32.xlu0 %v534, 126
    %v555 = vpop.permute.xlu0 %554
    %v559 = vmul.f32 %v547, %v551
    %v560 = vmul.f32 %v548, %v553
    %v561 = vmul.f32 %v549, %v555
    %562 = vrot.lane.b32.xlu0 %v532, 125
    %v563 = vpop.permute.xlu0 %562
    %564 = vrot.lane.b32.xlu0 %v533, 125
    %v565 = vpop.permute.xlu0 %564
    %566 = vrot.lane.b32.xlu0 %v534, 125
    %v567 = vpop.permute.xlu0 %566
    %v571 = vmul.f32 %v559, %v563
    %v572 = vmul.f32 %v560, %v565
    %v573 = vmul.f32 %v561, %v567
    %vm574 = vcmask 31744
    %v575 = vsel %vm574, %v501, -inf
    %576 = vmax.xlane.f32.xlu0 %v575
    %v577 = vpop.xlane.xlu0 %576
    %v578 = vsel %vm574, %v506, -inf
    %579 = vmax.xlane.f32.xlu0 %v578
    %v580 = vpop.xlane.xlu0 %579
    %v581 = vsel %vm574, %v511, -inf
    %582 = vmax.xlane.f32.xlu0 %v581
    %v583 = vpop.xlane.xlu0 %582
    %v584 = vlaneseq
    %v585 = vand.u32 %v584, 127
    %vm586 = vcmp.eq.f32.partialorder %v501, %v577
    %vm587 = vcmp.eq.f32.partialorder %v506, %v580
    %vm588 = vcmp.eq.f32.partialorder %v511, %v583
    %v589 = vsel %vm586, %v585, 4
    %v590 = vsel %vm587, %v585, 4
    %v591 = vsel %vm588, %v585, 4
    %v592 = vsel %vm574, %v589, 2147483647
    %v593 = vand.u32 %v592, 65535
    %v594 = vshra.s32 %v592, 16
    %v595 = vcvt.s32.f32 %v593
    %v596 = vcvt.s32.f32 %v594
    %597 = vmin.xlane.f32.xlu0 %v596
    %v598 = vpop.xlane.xlu0 %597
    %vm599 = vcmp.eq.f32.partialorder %v596, %v598
    %v600 = vsel %vm599, %v595, inf
    %601 = vmin.xlane.f32.xlu0 %v600
    %v602 = vpop.xlane.xlu0 %601
    %v603 = vcvt.f32.s32 %v602
    %v604 = vcvt.f32.s32 %v598
    %v605 = vshll.u32 %v604, 16
    %v606 = vadd.s32 %v605, %v603
    %v607 = vsel %vm574, %v590, 2147483647
    %v608 = vand.u32 %v607, 65535
    %v609 = vshra.s32 %v607, 16
    %v610 = vcvt.s32.f32 %v608
    %v611 = vcvt.s32.f32 %v609
    %612 = vmin.xlane.f32.xlu0 %v611
    %v613 = vpop.xlane.xlu0 %612
    %vm614 = vcmp.eq.f32.partialorder %v611, %v613
    %v615 = vsel %vm614, %v610, inf
    %616 = vmin.xlane.f32.xlu0 %v615
    %v617 = vpop.xlane.xlu0 %616
    %v618 = vcvt.f32.s32 %v617
    %v619 = vcvt.f32.s32 %v613
    %v620 = vshll.u32 %v619, 16
    %v621 = vadd.s32 %v620, %v618
    %v622 = vsel %vm574, %v591, 2147483647
    %v623 = vand.u32 %v622, 65535
    %v624 = vshra.s32 %v622, 16
    %v625 = vcvt.s32.f32 %v623
    %v626 = vcvt.s32.f32 %v624
    %627 = vmin.xlane.f32.xlu0 %v626
    %v628 = vpop.xlane.xlu0 %627
    %vm629 = vcmp.eq.f32.partialorder %v626, %v628
    %v630 = vsel %vm629, %v625, inf
    %631 = vmin.xlane.f32.xlu0 %v630
    %v632 = vpop.xlane.xlu0 %631
    %v633 = vcvt.f32.s32 %v632
    %v634 = vcvt.f32.s32 %v628
    %v635 = vshll.u32 %v634, 16
    %v636 = vadd.s32 %v635, %v633
    %v637 = vcvt.s32.f32 %v606
    %v638 = vcvt.s32.f32 %v621
    %v639 = vcvt.s32.f32 %v636
    %643 = vrot.lane.b32.xlu0 %v527, 4
    %v644 = vpop.permute.xlu0 %643
    %645 = vrot.lane.b32.xlu0 %v529, 4
    %v646 = vpop.permute.xlu0 %645
    %647 = vrot.lane.b32.xlu0 %v531, 4
    %v648 = vpop.permute.xlu0 %647
    %652 = vrot.lane.b32.xlu0 %v532, 8
    %v653 = vpop.permute.xlu0 %652
    %654 = vrot.lane.b32.xlu0 %v533, 8
    %v655 = vpop.permute.xlu0 %654
    %656 = vrot.lane.b32.xlu0 %v534, 8
    %v657 = vpop.permute.xlu0 %656
    %664 = vrot.lane.b32.xlu0 %v547, 9
    %v665 = vpop.permute.xlu0 %664
    %666 = vrot.lane.b32.xlu0 %v548, 9
    %v667 = vpop.permute.xlu0 %666
    %668 = vrot.lane.b32.xlu0 %v549, 9
    %v669 = vpop.permute.xlu0 %668
    %676 = vrot.lane.b32.xlu0 %v559, 10
    %v677 = vpop.permute.xlu0 %676
    %678 = vrot.lane.b32.xlu0 %v560, 10
    %v679 = vpop.permute.xlu0 %678
    %680 = vrot.lane.b32.xlu0 %v561, 10
    %v681 = vpop.permute.xlu0 %680
    %688 = vrot.lane.b32.xlu0 %v571, 11
    %v689 = vpop.permute.xlu0 %688
    %690 = vrot.lane.b32.xlu0 %v572, 11
    %v691 = vpop.permute.xlu0 %690
    %692 = vrot.lane.b32.xlu0 %v573, 11
    %v693 = vpop.permute.xlu0 %692
    %v697 = vsel %vm574, %v501, %v644
    %v698 = vsel %vm574, %v506, %v646
    %v699 = vsel %vm574, %v511, %v648
    %vm700 = vcmask 64512
    %v701 = vsel %vm700, %v697, %v653
    %v702 = vsel %vm700, %v698, %v655
    %v703 = vsel %vm700, %v699, %v657
    %vm704 = vcmask 72704
    %v705 = vsel %vm704, %v701, %v665
    %v706 = vsel %vm704, %v702, %v667
    %v707 = vsel %vm704, %v703, %v669
    %vm708 = vcmask 80896
    %v709 = vsel %vm708, %v705, %v677
    %v710 = vsel %vm708, %v706, %v679
    %v711 = vsel %vm708, %v707, %v681
    %vm712 = vcmask 89088
    %v713 = vsel %vm712, %v709, %v689
    %v714 = vsel %vm712, %v710, %v691
    %v715 = vsel %vm712, %v711, %v693
    %vm716 = vcmask 97280
    %v717 = vsel %vm716, %v713, %v637
    %v718 = vsel %vm716, %v714, %v638
    %v719 = vsel %vm716, %v715, %v639
    %vm720 = vcmask 105472
    %v721 = vsel %vm720, %v717, 0.0
    %v722 = vsel %vm720, %v718, 0.0
    %v723 = vsel %vm720, %v719, 0.0
    %vm724 = vcmask 130048
    %725 = vst.msk [vmem:[#allocation14] sm:$0xff] %vm724, %v721
    %726 = vst.msk [vmem:[#allocation14 + $0x8] sm:$0xff] %vm724, %v722
    %727 = vst.msk [vmem:[#allocation14 + $0x10] sm:$0xff] %vm724, %v723
    // Predicated region
    $region58: #{gcn_survival_forward.1} parent=1 // pred_check
      _
    $region59: #{gcn_survival_forward.1} parent=1 // pred_check_branch
      %729 = sbr.rel (0) target = $region61
    $region60: #{gcn_survival_forward.1} parent=1 // pred_region
      %s731 = ssub.s32 384, 384
      %732 = vsyncadd [#allocation4], %s731
      %s733 = sshll.u32 [#allocation14], 4
      %s734 = int_to_ptr.vmem [resolvable:$true] %s733
      %739 = dma.vmem_to_hbm [thread:$0]  %s734, 384, %s7, [#allocation4], 128, 128, 8
    $region61: #{gcn_survival_forward.1} parent=1 // pred_fallthru
      _
    // Predicated region
    $region62: #{gcn_survival_forward.1} parent=1 // pred_check
      _
    $region63: #{gcn_survival_forward.1} parent=1 // pred_check_branch
      %741 = sbr.rel (0) target = $region65
    $region64: #{gcn_survival_forward.1} parent=1 // pred_region
      %742 = dma.done [#allocation4], 384
    $region65: #{gcn_survival_forward.1} parent=1 // pred_fallthru
      _
    %743 = vsyncpa [#allocation3], 1
    %744 = vsyncpa [#allocation6], 1
    %745 = vsyncpa [#allocation9], 1
    %746 = vsyncpa [#allocation12], 1
    %747 = vsyncpa [#allocation4], 1

</llo_original>
